<compile_context>
chip_gen: v5e
topology: v5e:2x2
jax: 0.10.0
libtpu: 0.0.40
codegen_flags: <defaults>
</compile_context>

<pallas_src>
import jax
import jax.numpy as jnp
from jax.experimental import pallas as pl
from jax.experimental.pallas import tpu as pltpu

# ---- model dims (consistent with the module) --------------------------------
INPUT_DIM = 32      # X_train.shape[1]
HIDDEN_DIM = 15     # hidden_dim
OUTPUT_DIM = 4      # y_train.nunique()
BATCH = 64          # small demo batch; wrapper handles any batch

# lane-dense padded dims
HID_PAD = 128
OUT_PAD = 128

# Packed bf16 weight buffer layout (row offsets are multiples of 16 so bf16
# (16,128) sublane tiles stay aligned):
_W1_ROW = 0                       # rows [0, 32)   : W1 (INPUT_DIM, HID_PAD)
_W2_ROW = INPUT_DIM               # rows [32, 160) : W2 (HID_PAD,  OUT_PAD)
_PACK_ROWS = _W2_ROW + HID_PAD    # 160 rows -> (160, 128) bf16 ~ 40 KiB


def mlp_kernel(x_ref, w_ref, bias_ref, o_ref):
    # bf16 operands on the MXU, f32 accumulation; elementwise math in f32.
    x = x_ref[...].astype(jnp.bfloat16)                    # (Tm, 32)
    w1 = w_ref[_W1_ROW:_W1_ROW + INPUT_DIM, :]             # (32, 128)  bf16
    w2 = w_ref[_W2_ROW:_W2_ROW + HID_PAD, :]               # (128, 128) bf16
    b1 = bias_ref[0:1, :]                                  # (1, 128)   f32
    b2 = bias_ref[1:2, :]                                  # (1, 128)   f32

    h = jnp.dot(x, w1, preferred_element_type=jnp.float32) + b1   # (Tm,128) f32
    # sigmoid(h) = 0.5 * tanh(0.5*h) + 0.5  (exact; one EUP op, no select).
    h = 0.5 * jnp.tanh(0.5 * h) + 0.5
    # Padded hidden lanes compute sigmoid(0) = 0.5, but their W2 rows are
    # zero, so they contribute nothing; padded output lanes stay exactly 0.
    out = jnp.dot(h.astype(jnp.bfloat16), w2,
                  preferred_element_type=jnp.float32) + b2        # (Tm,128) f32
    o_ref[...] = out                                              # lane-dense vst


def pack_params(w1, b1, w2, b2):
    """Pack f32 W1:(in,hid), W2:(hid,out) into one zero-padded, tile-aligned
    bf16 buffer; biases go in a tiny separate f32 buffer (kept at f32).

    NOTE: the zero-initialization of both buffers is a correctness invariant
    (padded lanes must contribute exactly 0 to the output)."""
    p = jnp.zeros((_PACK_ROWS, 128), jnp.float32)
    p = p.at[_W1_ROW:_W1_ROW + INPUT_DIM, :HIDDEN_DIM].set(w1)
    p = p.at[_W2_ROW:_W2_ROW + HIDDEN_DIM, :OUTPUT_DIM].set(w2)
    bias = jnp.zeros((8, 128), jnp.float32)
    bias = bias.at[0, :HIDDEN_DIM].set(b1)
    bias = bias.at[1, :OUTPUT_DIM].set(b2)
    return p.astype(jnp.bfloat16), bias


def _round_up(n, m):
    return ((n + m - 1) // m) * m


def _pick_block_rows(b8):
    # Prefer >= 2 grid points (v7x: one per TensorCore), cap at 256 rows
    # (fills the 2x256x256 MXU on v6e/v7x once batch is large).
    for t in (256, 128, 64, 32, 16, 8):
        if b8 >= 2 * t:
            return t
    return 8


def mynn_forward(x, packed_w, biases, *, block_rows=None, return_padded=False):
    """x: (B, INPUT_DIM) f32 -> (B, OUTPUT_DIM) f32 (or (Bp, 128) if padded)."""
    B = x.shape[0]
    b8 = _round_up(B, 8)
    if block_rows is None:
        block_rows = _pick_block_rows(b8)
    Bp = _round_up(B, block_rows)
    if Bp != B:
        x = jnp.pad(x, ((0, Bp - B), (0, 0)))
    grid = (Bp // block_rows,)

    out_pad = pl.pallas_call(
        mlp_kernel,
        out_shape=jax.ShapeDtypeStruct((Bp, OUT_PAD), jnp.float32),
        grid=grid,
        in_specs=[
            # batch-tiled activations (double-buffered by the pipeline)
            pl.BlockSpec((block_rows, INPUT_DIM), lambda i: (i, 0)),
            # packed weights: same block every step -> DMA'd once, VMEM-resident
            pl.BlockSpec((_PACK_ROWS, 128), lambda i: (0, 0)),
            # f32 biases: same block every step -> VMEM-resident
            pl.BlockSpec((8, 128), lambda i: (0, 0)),
        ],
        out_specs=pl.BlockSpec((block_rows, OUT_PAD), lambda i: (i, 0)),
        compiler_params=pltpu.CompilerParams(
            dimension_semantics=("parallel",)),   # shard batch over v7x's 2 TCs
    )(x, packed_w, biases)

    if return_padded:
        return out_pad              # let a fused consumer read lanes [0, OUTPUT_DIM)
    return out_pad[:B, :OUTPUT_DIM]


def init_params(key):
    """Deterministic init mirroring nn.Linear's U(-1/sqrt(fan_in), 1/sqrt(fan_in)).
    Weights stored transposed vs. PyTorch: W1:(in,hidden), W2:(hidden,out)."""
    k1, k2, k3, k4 = jax.random.split(key, 4)
    bound1 = 1.0 / (INPUT_DIM ** 0.5)
    bound2 = 1.0 / (HIDDEN_DIM ** 0.5)
    w1 = jax.random.uniform(k1, (INPUT_DIM, HIDDEN_DIM), jnp.float32, -bound1, bound1)
    b1 = jax.random.uniform(k2, (HIDDEN_DIM,), jnp.float32, -bound1, bound1)
    w2 = jax.random.uniform(k3, (HIDDEN_DIM, OUTPUT_DIM), jnp.float32, -bound2, bound2)
    b2 = jax.random.uniform(k4, (OUTPUT_DIM,), jnp.float32, -bound2, bound2)
    return w1, b1, w2, b2


if __name__ == "__main__":
    key = jax.random.PRNGKey(0)
    kx, kp = jax.random.split(key)
    x = jax.random.normal(kx, (BATCH, INPUT_DIM), jnp.float32)
    w1, b1, w2, b2 = init_params(kp)

    # Pack once, outside the hot path (weights don't change between calls).
    packed_w, biases = pack_params(w1, b1, w2, b2)
    packed_w, biases = jax.block_until_ready((packed_w, biases))

    out = mynn_forward(x, packed_w, biases)
    out = jax.block_until_ready(out)

    # Reference: full-f32 forward of the module. Residual error is bf16 MXU
    # operand rounding only (bias in f32, sigmoid via exact tanh).
    ref = jax.nn.sigmoid(x @ w1 + b1[None, :]) @ w2 + b2[None, :]
    assert out.shape == (BATCH, OUTPUT_DIM)
    err = jnp.max(jnp.abs(out - ref))
    assert jnp.allclose(out, ref, atol=2e-2, rtol=2e-2), f"max abs err {err}"

    # TODO(synk): for repeated inference with static weights, add the P10
    # cross-call prefetch (SEMAPHORE+VMEM outputs) to hide the 40 KiB param DMA.

    print("KERNEL_OK")
</pallas_src>

<mosaic_0001>
module attributes {stable_mosaic.version = 11 : i64} {
  func.func @mlp_kernel(%arg0: i32, %arg1: memref<32x32xf32, #tpu.memory_space<vmem>>, %arg2: memref<160x128xbf16, #tpu.memory_space<vmem>>, %arg3: memref<8x128xf32, #tpu.memory_space<vmem>>, %arg4: memref<32x128xf32, #tpu.memory_space<vmem>>) attributes {dimension_semantics = [#tpu.dimension_semantics<parallel>], iteration_bounds = array<i64: 2>, scalar_prefetch = 0 : i64, scratch_operands = 0 : i64, tpu.core_type = #tpu.core_type<tc>, window_params = [{transform_indices = @transform_0, window_bounds = array<i64: 32, 32>}, {pipeline_mode = #tpu.pipeline_mode<synchronous>, transform_indices = @transform_1, window_bounds = array<i64: 160, 128>}, {pipeline_mode = #tpu.pipeline_mode<synchronous>, transform_indices = @transform_2, window_bounds = array<i64: 8, 128>}, {transform_indices = @transform_3, window_bounds = array<i64: 32, 128>}]} {
    %c0 = arith.constant 0 : index
    %c0_0 = arith.constant 0 : index
    %0 = vector.load %arg1[%c0, %c0_0] : memref<32x32xf32, #tpu.memory_space<vmem>>, vector<32x32xf32>
    %1 = arith.truncf %0 : vector<32x32xf32> to vector<32x32xbf16>
    %c0_1 = arith.constant 0 : index
    %c0_2 = arith.constant 0 : index
    %2 = vector.load %arg2[%c0_1, %c0_2] : memref<160x128xbf16, #tpu.memory_space<vmem>>, vector<32x128xbf16>
    %c32 = arith.constant 32 : index
    %c0_3 = arith.constant 0 : index
    %3 = vector.load %arg2[%c32, %c0_3] : memref<160x128xbf16, #tpu.memory_space<vmem>>, vector<128x128xbf16>
    %c0_4 = arith.constant 0 : index
    %c0_5 = arith.constant 0 : index
    %4 = vector.load %arg3[%c0_4, %c0_5] : memref<8x128xf32, #tpu.memory_space<vmem>>, vector<1x128xf32>
    %c1 = arith.constant 1 : index
    %c0_6 = arith.constant 0 : index
    %5 = vector.load %arg3[%c1, %c0_6] : memref<8x128xf32, #tpu.memory_space<vmem>>, vector<1x128xf32>
    %cst = arith.constant dense<0.000000e+00> : vector<32x128xf32>
    %6 = tpu.matmul %1, %2, %cst {dimension_numbers = #tpu.dot_dimension_numbers<[1], [0], [0], [1], [0, 0, 1, 1], [], []>} : vector<32x32xbf16>, vector<32x128xbf16>, vector<32x128xf32> -> vector<32x128xf32>
    %7 = vector.broadcast %4 : vector<1x128xf32> to vector<32x128xf32>
    %8 = arith.addf %6, %7 : vector<32x128xf32>
    %cst_7 = arith.constant 5.000000e-01 : f32
    %9 = vector.broadcast %cst_7 : f32 to vector<32x128xf32>
    %10 = arith.mulf %9, %8 : vector<32x128xf32>
    %11 = math.tanh %10 : vector<32x128xf32>
    %cst_8 = arith.constant 5.000000e-01 : f32
    %12 = vector.broadcast %cst_8 : f32 to vector<32x128xf32>
    %13 = arith.mulf %12, %11 : vector<32x128xf32>
    %cst_9 = arith.constant 5.000000e-01 : f32
    %14 = vector.broadcast %cst_9 : f32 to vector<32x128xf32>
    %15 = arith.addf %13, %14 : vector<32x128xf32>
    %16 = arith.truncf %15 : vector<32x128xf32> to vector<32x128xbf16>
    %cst_10 = arith.constant dense<0.000000e+00> : vector<32x128xf32>
    %17 = tpu.matmul %16, %3, %cst_10 {dimension_numbers = #tpu.dot_dimension_numbers<[1], [0], [0], [1], [0, 0, 1, 1], [], []>} : vector<32x128xbf16>, vector<128x128xbf16>, vector<32x128xf32> -> vector<32x128xf32>
    %18 = vector.broadcast %5 : vector<1x128xf32> to vector<32x128xf32>
    %19 = arith.addf %17, %18 : vector<32x128xf32>
    %c0_11 = arith.constant 0 : index
    %c0_12 = arith.constant 0 : index
    %20 = vector.load %arg4[%c0_11, %c0_12] : memref<32x128xf32, #tpu.memory_space<vmem>>, vector<32x128xf32>
    tpu.vector_store %arg4[%c0_11, %c0_12], %19 {strides = array<i32>} : memref<32x128xf32, #tpu.memory_space<vmem>>, vector<32x128xf32>,
    return
  }
  func.func @transform_0(%arg0: i32) -> (i32, i32) {
    %c0_i32 = arith.constant 0 : i32
    %c0_i32_0 = arith.constant 0 : i32
    return %arg0, %c0_i32 : i32, i32
  }
  func.func @transform_1(%arg0: i32) -> (i32, i32) {
    %c0_i32 = arith.constant 0 : i32
    %c0_i32_0 = arith.constant 0 : i32
    %c0_i32_1 = arith.constant 0 : i32
    return %c0_i32, %c0_i32_0 : i32, i32
  }
  func.func @transform_2(%arg0: i32) -> (i32, i32) {
    %c0_i32 = arith.constant 0 : i32
    %c0_i32_0 = arith.constant 0 : i32
    %c0_i32_1 = arith.constant 0 : i32
    return %c0_i32, %c0_i32_0 : i32, i32
  }
  func.func @transform_3(%arg0: i32) -> (i32, i32) {
    %c0_i32 = arith.constant 0 : i32
    %c0_i32_0 = arith.constant 0 : i32
    return %arg0, %c0_i32 : i32, i32
  }
}

</mosaic_0001>

<llo_original>
// kernel: tpu_custom_call.1
$region0: #{tpu_custom_call.1}
  #allocation0 [shape = 'u32[]', space=smem, size = 0x4, offset = 0x4, fixed_abs, tag = 'smem constant byte address 0x4 - core index']
  #allocation1 [shape = 'u32[72,128]{1,0:T(1,128)}', space=vmem, size = 0x9000, scoped, tag = 'internal scratch']
  %s0 = inlined_call_operand.vmem [shape: f32[64,32], index: 0, kind: input, shape index: {}]
  %s1 = inlined_call_operand.vmem [shape: bf16[160,128], index: 1, kind: input, shape index: {}]
  %s2 = inlined_call_operand.vmem [shape: f32[8,128], index: 2, kind: input, shape index: {}]
  %s3 = inlined_call_operand.hbm [shape: f32[64,128], index: 3, kind: output, shape index: {}]
  %s4 = sld [smem:[#allocation0]]
  $region45: #{tpu_custom_call.1} parent=0
    _
  %s6 = ssub.s32 1, %s4
  %s7 = scalar_select 0, %s6, %s4
  $region1: #{tpu_custom_call.1} parent=0
    #allocation2 [shape = 'u8[32768]{0}', space=vmem, size = 0x8000, scoped, tag = 'output window, operand 0']
    #allocation3 [shape = 's32[2]{0}', space=sflag, size = 0x8, scoped, tag = 'scoped memory for tpu_custom_call.1']
    %8 = vsyncpa [#allocation3], 0
    %s9 = scalar_lea.sflag [#allocation3], 1
    %10 = vsyncpa %s9, 0
    loop: start=0, step=1, limit=4
    $region2: #{tpu_custom_call.1} parent=1 // loop_pre_header
      _
    $region3: #{tpu_custom_call.1} parent=1 // loop_header
      %s12 = sphi 0, %s16
      %p13 = scmp.ge.s32.totalorder %s12, 4
      %s22 = sphi 0, %s24
      %s25 = sphi 0, %s22
      %s26 = sphi 0, %s25
      %s42 = sphi 0, %s26
      %s46 = sphi 0, %s46
      %s48 = sphi 0, %s46
      %s49 = sphi 0, %s48
      %s63 = sphi 0, %s49
      %s67 = sphi 0, %s67
      %s69 = sphi 0, %s67
      %s70 = sphi 0, %s69
      %s84 = sphi 0, %s70
      %s90 = sphi 0, %s92
      %s93 = sphi 0, %s90
      %s94 = sphi 0, %s93
      %s110 = sphi 0, %s94
    $region4: #{tpu_custom_call.1} parent=1 // loop_header_branch
      %15 = sbr.rel (%p13) target = $region8
    $region5: #{tpu_custom_call.1} parent=1 // loop_body
      %s17 = ssub.s32 %s12, 1
      %s18 = ssub.s32 %s12, 2
      %s19 = sadd.s32 %s12, 1
      %s20 = ssub.s32 %s12, %s19
      %p21 = scmp.eq.s32.totalorder %s20, 0
      %s23 = sadd.s32 %s22, 1
      %s24 = scalar_select %p21, %s22, %s23
      %p27 = pneg %p21
      %p28 = scmp.eq.s32.totalorder %s12, 1
      %p29 = por %p27, %p28
      %p30 = scmp.ne.s32.totalorder %s22, %s25
      %p31 = scmp.eq.s32.totalorder %s12, 0
      %p32 = por %p30, %p31
      %p33 = scmp.ne.s32.totalorder %s22, %s25
      %p34 = scmp.eq.s32.totalorder %s17, 1
      %p35 = por %p33, %p34
      %p36 = scmp.ne.s32.totalorder %s25, %s26
      %p37 = scmp.eq.s32.totalorder %s17, 0
      %p38 = por %p36, %p37
      %p39 = scmp.ne.s32.totalorder %s25, %s26
      %p40 = scmp.eq.s32.totalorder %s18, 1
      %p41 = por %p39, %p40
      %p43 = scmp.ne.s32.totalorder %s26, %s42
      %p44 = scmp.eq.s32.totalorder %s18, 0
      %p45 = por %p43, %p44
      %s47 = sadd.s32 %s46, 1
      %p50 = scmp.eq.s32.totalorder %s12, 1
      %p51 = scmp.ne.s32.totalorder %s46, %s48
      %p52 = scmp.eq.s32.totalorder %s12, 0
      %p53 = por %p51, %p52
      %p54 = scmp.ne.s32.totalorder %s46, %s48
      %p55 = scmp.eq.s32.totalorder %s17, 1
      %p56 = por %p54, %p55
      %p57 = scmp.ne.s32.totalorder %s48, %s49
      %p58 = scmp.eq.s32.totalorder %s17, 0
      %p59 = por %p57, %p58
      %p60 = scmp.ne.s32.totalorder %s48, %s49
      %p61 = scmp.eq.s32.totalorder %s18, 1
      %p62 = por %p60, %p61
      %p64 = scmp.ne.s32.totalorder %s49, %s63
      %p65 = scmp.eq.s32.totalorder %s18, 0
      %p66 = por %p64, %p65
      %s68 = sadd.s32 %s67, 1
      %p71 = scmp.eq.s32.totalorder %s12, 1
      %p72 = scmp.ne.s32.totalorder %s67, %s69
      %p73 = scmp.eq.s32.totalorder %s12, 0
      %p74 = por %p72, %p73
      %p75 = scmp.ne.s32.totalorder %s67, %s69
      %p76 = scmp.eq.s32.totalorder %s17, 1
      %p77 = por %p75, %p76
      %p78 = scmp.ne.s32.totalorder %s69, %s70
      %p79 = scmp.eq.s32.totalorder %s17, 0
      %p80 = por %p78, %p79
      %p81 = scmp.ne.s32.totalorder %s69, %s70
      %p82 = scmp.eq.s32.totalorder %s18, 1
      %p83 = por %p81, %p82
      %p85 = scmp.ne.s32.totalorder %s70, %s84
      %p86 = scmp.eq.s32.totalorder %s18, 0
      %p87 = por %p85, %p86
      %s88 = ssub.s32 %s12, %s19
      %p89 = scmp.eq.s32.totalorder %s88, 0
      %s91 = sadd.s32 %s90, 1
      %s92 = scalar_select %p89, %s90, %s91
      %p95 = pneg %p89
      %p96 = scmp.eq.s32.totalorder %s12, 1
      %p97 = por %p95, %p96
      %p98 = scmp.ne.s32.totalorder %s90, %s93
      %p99 = scmp.eq.s32.totalorder %s12, 0
      %p100 = por %p98, %p99
      %p101 = scmp.ne.s32.totalorder %s90, %s93
      %p102 = scmp.eq.s32.totalorder %s17, 1
      %p103 = por %p101, %p102
      %p104 = scmp.ne.s32.totalorder %s93, %s94
      %p105 = scmp.eq.s32.totalorder %s17, 0
      %p106 = por %p104, %p105
      %p107 = scmp.ne.s32.totalorder %s93, %s94
      %p108 = scmp.eq.s32.totalorder %s18, 1
      %p109 = por %p107, %p108
      %p111 = scmp.ne.s32.totalorder %s94, %s110
      %p112 = scmp.eq.s32.totalorder %s18, 0
      %p113 = por %p111, %p112
      %p114 = scmp.le.s32.totalorder 1, %s12
      %p115 = scmp.lt.s32.totalorder %s12, 3
      %p116 = pnand %p114, %p115
      %p117 = pneg %p116
      // Predicated region
      $region9: #{tpu_custom_call.1} parent=5 // pred_check
        _
      $region10: #{tpu_custom_call.1} parent=5 // pred_check_branch
        %119 = sbr.rel (%p116) target = $region12
      $region11: #{tpu_custom_call.1} parent=5 // pred_region
        %s120 = ssub.s32 %s12, 1
        // Predicated region
        $region13: #{tpu_custom_call.1} parent=11 // pred_check
          %p121 = pneg %p59
        $region14: #{tpu_custom_call.1} parent=11 // pred_check_branch
          %123 = sbr.rel (%p121) target = $region16
        $region15: #{tpu_custom_call.1} parent=11 // pred_region
          _
        $region16: #{tpu_custom_call.1} parent=11 // pred_fallthru
          _
        // Predicated region
        $region17: #{tpu_custom_call.1} parent=11 // pred_check
          %p124 = pneg %p80
        $region18: #{tpu_custom_call.1} parent=11 // pred_check_branch
          %126 = sbr.rel (%p124) target = $region20
        $region19: #{tpu_custom_call.1} parent=11 // pred_region
          _
        $region20: #{tpu_custom_call.1} parent=11 // pred_fallthru
          _
      $region12: #{tpu_custom_call.1} parent=5 // pred_fallthru
        _
      %p127 = scmp.lt.s32.totalorder %s12, 2
      // Predicated region
      $region21: #{tpu_custom_call.1} parent=5 // pred_check
        %p128 = pneg %p127
      $region22: #{tpu_custom_call.1} parent=5 // pred_check_branch
        %130 = sbr.rel (%p128) target = $region24
      $region23: #{tpu_custom_call.1} parent=5 // pred_region
        // Predicated region
        $region25: #{tpu_custom_call.1} parent=23 // pred_check
          %p131 = pneg %p32
        $region26: #{tpu_custom_call.1} parent=23 // pred_check_branch
          %133 = sbr.rel (%p131) target = $region28
        $region27: #{tpu_custom_call.1} parent=23 // pred_region
          %s134 = smul.u32 4, %s12
          %p135 = scmp.lt.s32.totalorder %s134, 7
          %s136 = scalar_select %p135, %s134, 7
          %s137 = smul.addr %s136, 8
          %s138 = scalar_lea.vmem %s0, %s137
          %s139 = smul.u32 4, %s12
        $region28: #{tpu_custom_call.1} parent=23 // pred_fallthru
          _
      $region24: #{tpu_custom_call.1} parent=5 // pred_fallthru
        _
      %p140 = scmp.le.s32.totalorder 1, %s12
      %p141 = scmp.lt.s32.totalorder %s12, 3
      %p142 = pnand %p140, %p141
      %p143 = pneg %p142
      // Predicated region
      $region29: #{tpu_custom_call.1} parent=5 // pred_check
        _
      $region30: #{tpu_custom_call.1} parent=5 // pred_check_branch
        %145 = sbr.rel (%p142) target = $region32
      $region31: #{tpu_custom_call.1} parent=5 // pred_region
        %s146 = ssub.s32 %s12, 1
        %s147 = smul.u32 4, %s17
        %p148 = scmp.lt.s32.totalorder %s147, 7
        %s149 = scalar_select %p148, %s147, 7
        %s150 = smul.addr %s149, 8
        %s151 = scalar_lea.vmem %s0, %s150
        %p152 = pneg %p38
        %p153 = pneg %p35
        %p154 = pneg %p59
        %p155 = pneg %p56
        %p156 = pneg %p80
        %p157 = pneg %p77
        %p158 = pneg %p106
        %p159 = pneg %p103
        %s160 = sand.u32 %s93, 1
        %s161 = scalar_lea.sflag [#allocation3], %s160
        %s162 = sand.u32 %s93, 1
        %s163 = smul.addr %s162, 32
        %s164 = scalar_lea.vmem [#allocation2], %s163
        %s165 = smul.u32 4, %s17
        %p166 = scmp.lt.s32.totalorder %s165, 7
        %s167 = scalar_select %p166, %s165, 7
        %s168 = smul.addr %s167, 8
        %s169 = scalar_lea.vmem %s0, %s168
        %s170 = smul.u32 4, %s17
        %s171 = smul.u32 4, %s17
        %v173 = vld [vmem:[%s169] sm:$0xff]
        %v174 = vld [vmem:[%s169 + $0x8] sm:$0xff]
        %v175 = vld [vmem:[%s169 + $0x10] sm:$0xff]
        %v176 = vld [vmem:[%s169 + $0x18] sm:$0xff]
        %v177 = vpack.c.bf16 %v174, %v173
        %v178 = vpack.c.bf16 %v176, %v175
        %v179 = vld [vmem:[%s1] sm:$0xf]
        %v180 = vld [vmem:[%s1 + $0x4] sm:$0xf]
        %v181 = vld [vmem:[%s1 + $0x8] sm:$0xf]
        %v182 = vld [vmem:[%s1 + $0xc] sm:$0xf]
        %v183 = vld [vmem:[%s1 + $0x10] sm:$0xf]
        %v184 = vld [vmem:[%s1 + $0x14] sm:$0xf]
        %v185 = vld [vmem:[%s1 + $0x18] sm:$0xf]
        %v186 = vld [vmem:[%s1 + $0x1c] sm:$0xf]
        %v187 = vld [vmem:[%s1 + $0x20] sm:$0xf]
        %v188 = vld [vmem:[%s1 + $0x24] sm:$0xf]
        %v189 = vld [vmem:[%s1 + $0x28] sm:$0xf]
        %v190 = vld [vmem:[%s1 + $0x2c] sm:$0xf]
        %v191 = vld [vmem:[%s1 + $0x30] sm:$0xf]
        %v192 = vld [vmem:[%s1 + $0x34] sm:$0xf]
        %v193 = vld [vmem:[%s1 + $0x38] sm:$0xf]
        %v194 = vld [vmem:[%s1 + $0x3c] sm:$0xf]
        %v195 = vld [vmem:[%s1 + $0x40] sm:$0xf]
        %v196 = vld [vmem:[%s1 + $0x44] sm:$0xf]
        %v197 = vld [vmem:[%s1 + $0x48] sm:$0xf]
        %v198 = vld [vmem:[%s1 + $0x4c] sm:$0xf]
        %v199 = vld [vmem:[%s2] sm:$0x1]
        %v200 = vld [vmem:[%s2 + $0x1] sm:$0x1]
        %v201 = vperm.slane %v199, 0
        %v206 = vunpack.c.l.b16 %v179
        %v207 = vunpack.c.l.b16 %v180
        %v208 = vunpack.c.l.b16 %v181
        %v209 = vunpack.c.l.b16 %v182
        %v210 = vpack.c.b16 %v207, %v206
        %v211 = vpack.c.b16 %v209, %v208
        %vm214 = vcmask 261120
        %v216 = vsel %vm214, %v177, 0
        %v219 = vsel %vm214, %v178, 0
        %221 = vmatpush.bf16.msra.mxu0 0
        %222 = vmatpush.bf16.msra.mxu0 0
        %223 = vmatpush.bf16.msra.mxu0 0
        %224 = vmatpush.bf16.msra.mxu0 0
        %225 = vmatpush.bf16.msra.mxu0 0
        %226 = vmatpush.bf16.msra.mxu0 0
        %227 = vmatpush.bf16.msra.mxu0 %v211
        %228 = vmatpush.bf16.msra.mxu0 %v210
        %229 = vmatmul.bf16.gmra.mxu0 %v216
        %v230 = vpop.f32.mrf.mxu0
        %v231 = vadd.f32 %v201, %v230
        %v232 = vpop.f32.mrf.mxu0
        %v233 = vadd.f32 %v201, %v232
        %234 = vmatmul.bf16.gmra.mxu0 %v219
        %v235 = vpop.f32.mrf.mxu0
        %v236 = vadd.f32 %v201, %v235
        %v237 = vpop.f32.mrf.mxu0
        %v238 = vadd.f32 %v201, %v237
        %239 = vdwg.mxu0
        %v240 = vmul.f32 %v231, 0.5
        %v241 = vmul.f32 %v233, 0.5
        %v242 = vmul.f32 %v236, 0.5
        %v243 = vmul.f32 %v238, 0.5
        %v244 = vtanh.pop %v240
        %v245 = vtanh.pop %v241
        %v246 = vtanh.pop %v242
        %v247 = vtanh.pop %v243
        %v248 = vmul.f32 %v244, 0.5
        %v249 = vmul.f32 %v245, 0.5
        %v250 = vmul.f32 %v246, 0.5
        %v251 = vmul.f32 %v247, 0.5
        %v252 = vadd.f32 %v248, 0.5
        %v253 = vadd.f32 %v249, 0.5
        %v254 = vadd.f32 %v250, 0.5
        %v255 = vadd.f32 %v251, 0.5
        %v256 = vpack.c.bf16 %v253, %v252
        %v257 = vpack.c.bf16 %v255, %v254
        %v258 = vperm.slane %v200, 0
        %v275 = vunpack.c.l.b16 %v183
        %v276 = vunpack.c.l.b16 %v184
        %v277 = vunpack.c.l.b16 %v185
        %v278 = vunpack.c.l.b16 %v186
        %v279 = vunpack.c.l.b16 %v187
        %v280 = vunpack.c.l.b16 %v188
        %v281 = vunpack.c.l.b16 %v189
        %v282 = vunpack.c.l.b16 %v190
        %v283 = vunpack.c.l.b16 %v191
        %v284 = vunpack.c.l.b16 %v192
        %v285 = vunpack.c.l.b16 %v193
        %v286 = vunpack.c.l.b16 %v194
        %v287 = vunpack.c.l.b16 %v195
        %v288 = vunpack.c.l.b16 %v196
        %v289 = vunpack.c.l.b16 %v197
        %v290 = vunpack.c.l.b16 %v198
        %v291 = vpack.c.b16 %v276, %v275
        %v292 = vpack.c.b16 %v278, %v277
        %v293 = vpack.c.b16 %v280, %v279
        %v294 = vpack.c.b16 %v282, %v281
        %v295 = vpack.c.b16 %v284, %v283
        %v296 = vpack.c.b16 %v286, %v285
        %v297 = vpack.c.b16 %v288, %v287
        %v298 = vpack.c.b16 %v290, %v289
        %307 = vmatpush.bf16.msra.mxu0 %v298
        %308 = vmatpush.bf16.msra.mxu0 %v297
        %309 = vmatpush.bf16.msra.mxu0 %v296
        %310 = vmatpush.bf16.msra.mxu0 %v295
        %311 = vmatpush.bf16.msra.mxu0 %v294
        %312 = vmatpush.bf16.msra.mxu0 %v293
        %313 = vmatpush.bf16.msra.mxu0 %v292
        %314 = vmatpush.bf16.msra.mxu0 %v291
        %315 = vmatmul.bf16.gmra.mxu0 %v256
        %v316 = vpop.f32.mrf.mxu0
        %v317 = vadd.f32 %v258, %v316
        %v318 = vpop.f32.mrf.mxu0
        %v319 = vadd.f32 %v258, %v318
        %320 = vmatmul.bf16.gmra.mxu0 %v257
        %v321 = vpop.f32.mrf.mxu0
        %v322 = vadd.f32 %v258, %v321
        %v323 = vpop.f32.mrf.mxu0
        %v324 = vadd.f32 %v258, %v323
        %325 = vdwg.mxu0
        %326 = vst [vmem:[%s164] sm:$0xff] %v317
        %327 = vst [vmem:[%s164 + $0x8] sm:$0xff] %v319
        %328 = vst [vmem:[%s164 + $0x10] sm:$0xff] %v322
        %329 = vst [vmem:[%s164 + $0x18] sm:$0xff] %v324
        %s330 = sand.u32 %s93, 1
        %s331 = scalar_lea.sflag [#allocation3], %s330
        %s332 = sand.u32 %s93, 1
        %s333 = smul.addr %s332, 32
        %s334 = scalar_lea.vmem [#allocation2], %s333
        // Predicated region
        $region33: #{tpu_custom_call.1} parent=31 // pred_check
          %p335 = pneg %p103
        $region34: #{tpu_custom_call.1} parent=31 // pred_check_branch
          %337 = sbr.rel (%p335) target = $region36
        $region35: #{tpu_custom_call.1} parent=31 // pred_region
          %s338 = smul.u32 4, %s17
          %340 = vsyncadd %s331, 0
          %s341 = smul.addr %s338, 8
          %s342 = scalar_lea.hbm %s3, %s341
          %s343 = sshll.u32 %s334, 4
          %s344 = int_to_ptr.vmem [resolvable:$true] %s343
          %s345 = sshll.u32 %s342, 4
          %s346 = int_to_ptr.hbm [resolvable:$true] %s345
          %351 = dma.vmem_to_hbm [thread:$0]  %s344, 512, %s346, %s331, 128, 128, 8
        $region36: #{tpu_custom_call.1} parent=31 // pred_fallthru
          _
      $region32: #{tpu_custom_call.1} parent=5 // pred_fallthru
        _
      %p352 = scmp.le.s32.totalorder 2, %s12
      // Predicated region
      $region37: #{tpu_custom_call.1} parent=5 // pred_check
        %p353 = pneg %p352
      $region38: #{tpu_custom_call.1} parent=5 // pred_check_branch
        %355 = sbr.rel (%p353) target = $region40
      $region39: #{tpu_custom_call.1} parent=5 // pred_region
        %s356 = ssub.s32 %s12, 2
        // Predicated region
        $region41: #{tpu_custom_call.1} parent=39 // pred_check
          %p357 = pneg %p109
        $region42: #{tpu_custom_call.1} parent=39 // pred_check_branch
          %359 = sbr.rel (%p357) target = $region44
        $region43: #{tpu_custom_call.1} parent=39 // pred_region
          %s360 = sand.u32 %s94, 1
          %s361 = scalar_lea.sflag [#allocation3], %s360
          %s362 = sand.u32 %s94, 1
          %s363 = smul.addr %s362, 32
          %s364 = scalar_lea.vmem [#allocation2], %s363
          %366 = dma.done %s361, 512
        $region44: #{tpu_custom_call.1} parent=39 // pred_fallthru
          _
      $region40: #{tpu_custom_call.1} parent=5 // pred_fallthru
        _
    $region6: #{tpu_custom_call.1} parent=1 // loop_footer
      %s16 = sadd.s32 1, %s12
    $region7: #{tpu_custom_call.1} parent=1 // loop_footer_branch
      %11 = sbr.rel target = $region3
    $region8: #{tpu_custom_call.1} parent=1 // loop_exit
      _
    %367 = vsyncpa [#allocation3], 1
    %s368 = scalar_lea.sflag [#allocation3], 1
    %369 = vsyncpa %s368, 1

</llo_original>
